<compile_context>
chip_gen: v5e
topology: v5e:2x2
jax: 0.10.0
libtpu: 0.0.40
codegen_flags: <defaults>
</compile_context>

<pallas_src>
import math

import jax
import jax.numpy as jnp
import numpy as np
from jax.experimental import pallas as pl
from jax.experimental.pallas import tpu as pltpu

TM_TARGET = 512   # node-dimension tile target (mem-bound sweet spot)
LANE = 128        # minimum lane-dense output width


# --------------------------------------------------------------------------
# small shape helpers
# --------------------------------------------------------------------------
def _round_up(x, m):
    return ((x + m - 1) // m) * m


def _pad_rows(x, rows):
    pad = rows - x.shape[0]
    if pad > 0:
        x = jnp.pad(x, ((0, pad), (0, 0)))
    return x


def _pad_cols(x, cols):
    pad = cols - x.shape[-1]
    if pad > 0:
        x = jnp.pad(x, ((0, 0), (0, pad)))
    return x


# --------------------------------------------------------------------------
# parameter folding (BN-eval -> affine folded into linear 1)
# --------------------------------------------------------------------------
def _fold_mlp2(p, eps=1e-5, out_pad=None):
    """Returns bf16 matmul weights + f32 shift/bias rows for a 2-layer MLP."""
    scale = p["gamma"] / jnp.sqrt(p["var"] + eps)
    shift = p["beta"] - p["mean"] * scale
    w1 = p["w1"] * scale[None, :]
    s1 = shift if p["b1"] is None else p["b1"] * scale + shift
    w2 = p["w2"]
    b2 = p["b2"] if p["b2"] is not None else jnp.zeros((w2.shape[1],), jnp.float32)
    b2 = b2.reshape(1, -1)
    if out_pad is not None:
        w2 = _pad_cols(w2, out_pad)
        b2 = _pad_cols(b2, out_pad)
    return dict(
        w1=w1.astype(jnp.bfloat16),
        s1=s1.reshape(1, -1).astype(jnp.float32),
        w2=w2.astype(jnp.bfloat16),
        b2=b2.astype(jnp.float32),
        alpha=jnp.asarray(p["alpha"], jnp.float32),
    )


# --------------------------------------------------------------------------
# in-kernel helpers
# --------------------------------------------------------------------------
def _mlp2_tile(x, w1_ref, s1_ref, w2_ref, b2_ref, alpha):
    """y = PReLU(x @ W1' + shift) @ W2 + b2   (hidden stays in VMEM)."""
    h = jnp.dot(x.astype(jnp.bfloat16), w1_ref[...],
                preferred_element_type=jnp.float32)
    h = h + s1_ref[...]
    h = jnp.where(h > 0, h, alpha * h)
    y = jnp.dot(h.astype(jnp.bfloat16), w2_ref[...],
                preferred_element_type=jnp.float32)
    return y + b2_ref[...]


def _emb_kernel(x_ref, w1_ref, s1_ref, w2_ref, b2_ref, scal_ref, o_ref):
    y = _mlp2_tile(x_ref[...], w1_ref, s1_ref, w2_ref, b2_ref, scal_ref[0])
    o_ref[...] = y.astype(o_ref.dtype)


def _emb_label_kernel(x_ref, w1_ref, s1_ref, w2_ref, b2_ref,
                      l_ref, lw1_ref, ls1_ref, lw2_ref, lb2_ref,
                      scal_ref, o_ref):
    y = _mlp2_tile(x_ref[...], w1_ref, s1_ref, w2_ref, b2_ref, scal_ref[0])
    y = y + _mlp2_tile(l_ref[...], lw1_ref, ls1_ref, lw2_ref, lb2_ref,
                       scal_ref[1])
    o_ref[...] = y.astype(o_ref.dtype)


def _make_combine_kernel(T, L):
    """Polynomial sum + residual + PReLU + lin_x MLP + label sum + lin_l MLP."""
    def kernel(*refs):
        e_refs = refs[:T]
        init_ref = refs[T]
        wres_ref = refs[T + 1]
        lf_refs = refs[T + 2:T + 2 + L]
        xw1, xs1, xw2, xb2 = refs[T + 2 + L:T + 6 + L]
        lw1, ls1, lw2, lb2 = refs[T + 6 + L:T + 10 + L]
        scal = refs[T + 10 + L]          # SMEM: [coefs(T), W_l(L), a, a_x, a_l]
        o_ref = refs[T + 11 + L]

        # polynomial weighted sum over metapath embeddings
        x = e_refs[0][...].astype(jnp.float32) * scal[0]
        for t in range(1, T):
            x = x + e_refs[t][...].astype(jnp.float32) * scal[t]
        # residual connection through lin_residue
        x = x + jnp.dot(init_ref[...].astype(jnp.bfloat16), wres_ref[...],
                        preferred_element_type=jnp.float32)
        # top-level PReLU (dropout == identity in eval)
        a = scal[T + L]
        x = jnp.where(x > 0, x, a * x)
        # lin_x MLP (2-layer, hidden stays in VMEM)
        y = _mlp2_tile(x, xw1, xs1, xw2, xb2, scal[T + L + 1])
        # weighted label combination + lin_l MLP, fused add
        lx = lf_refs[0][...] * scal[T]
        for i in range(1, L):
            lx = lx + lf_refs[i][...] * scal[T + i]
        y = y + _mlp2_tile(lx, lw1, ls1, lw2, lb2, scal[T + L + 2])
        o_ref[...] = y.astype(o_ref.dtype)
    return kernel


# --------------------------------------------------------------------------
# pallas_call wrappers
# --------------------------------------------------------------------------
def emb_apply(x, fx, lab=None, fl=None, tm=TM_TARGET):
    """Fused metapath embedding: mlp2(x) [+ mlp2(label)] -> bf16 (M, emb_dim)."""
    M, K = x.shape
    assert M % tm == 0
    E = fx["w1"].shape[1]
    D = fx["w2"].shape[1]

    in_specs = [
        pl.BlockSpec((tm, K), lambda i: (i, 0)),
        pl.BlockSpec((K, E), lambda i: (0, 0)),
        pl.BlockSpec((1, E), lambda i: (0, 0)),
        pl.BlockSpec((E, D), lambda i: (0, 0)),
        pl.BlockSpec((1, D), lambda i: (0, 0)),
    ]
    inputs = [x, fx["w1"], fx["s1"], fx["w2"], fx["b2"]]
    if lab is None:
        kernel = _emb_kernel
        scal = jnp.stack([fx["alpha"]]).astype(jnp.float32)
    else:
        kernel = _emb_label_kernel
        Kl = lab.shape[1]
        in_specs += [
            pl.BlockSpec((tm, Kl), lambda i: (i, 0)),
            pl.BlockSpec((Kl, E), lambda i: (0, 0)),
            pl.BlockSpec((1, E), lambda i: (0, 0)),
            pl.BlockSpec((E, D), lambda i: (0, 0)),
            pl.BlockSpec((1, D), lambda i: (0, 0)),
        ]
        inputs += [lab, fl["w1"], fl["s1"], fl["w2"], fl["b2"]]
        scal = jnp.stack([fx["alpha"], fl["alpha"]]).astype(jnp.float32)
    in_specs.append(pl.BlockSpec(memory_space=pltpu.MemorySpace.SMEM))
    inputs.append(scal)

    return pl.pallas_call(
        kernel,
        out_shape=jax.ShapeDtypeStruct((M, D), jnp.bfloat16),
        grid_spec=pltpu.PrefetchScalarGridSpec(
            num_scalar_prefetch=0,
            grid=(M // tm,),
            in_specs=in_specs,
            out_specs=pl.BlockSpec((tm, D), lambda i: (i, 0)),
        ),
        compiler_params=pltpu.CompilerParams(dimension_semantics=("parallel",)),
    )(*inputs)


def combine_apply(emb_terms, coefs, init_x, w_res, lfeats, wl,
                  fx, fl, prelu_alpha, nclass, tm=TM_TARGET):
    T, L = len(emb_terms), len(lfeats)
    M, D = emb_terms[0].shape
    assert M % tm == 0
    Ki = init_x.shape[1]
    Kl = lfeats[0].shape[1]
    H_x = fx["w1"].shape[1]
    H_l = fl["w1"].shape[1]
    NO = fx["w2"].shape[1]          # lane-dense padded output width

    scal = jnp.concatenate([
        jnp.asarray(coefs, jnp.float32).reshape(-1),
        jnp.asarray(wl, jnp.float32).reshape(-1),
        jnp.asarray(prelu_alpha, jnp.float32).reshape(1),
        jnp.asarray(fx["alpha"], jnp.float32).reshape(1),
        jnp.asarray(fl["alpha"], jnp.float32).reshape(1),
    ])

    in_specs = (
        [pl.BlockSpec((tm, D), lambda i: (i, 0)) for _ in range(T)]
        + [pl.BlockSpec((tm, Ki), lambda i: (i, 0)),
           pl.BlockSpec((Ki, D), lambda i: (0, 0))]
        + [pl.BlockSpec((tm, Kl), lambda i: (i, 0)) for _ in range(L)]
        + [pl.BlockSpec((D, H_x), lambda i: (0, 0)),
           pl.BlockSpec((1, H_x), lambda i: (0, 0)),
           pl.BlockSpec((H_x, NO), lambda i: (0, 0)),
           pl.BlockSpec((1, NO), lambda i: (0, 0)),
           pl.BlockSpec((Kl, H_l), lambda i: (0, 0)),
           pl.BlockSpec((1, H_l), lambda i: (0, 0)),
           pl.BlockSpec((H_l, NO), lambda i: (0, 0)),
           pl.BlockSpec((1, NO), lambda i: (0, 0)),
           pl.BlockSpec(memory_space=pltpu.MemorySpace.SMEM)]
    )
    inputs = (list(emb_terms) + [init_x, w_res] + list(lfeats)
              + [fx["w1"], fx["s1"], fx["w2"], fx["b2"],
                 fl["w1"], fl["s1"], fl["w2"], fl["b2"], scal])

    out = pl.pallas_call(
        _make_combine_kernel(T, L),
        out_shape=jax.ShapeDtypeStruct((M, NO), jnp.float32),
        grid_spec=pltpu.PrefetchScalarGridSpec(
            num_scalar_prefetch=0,
            grid=(M // tm,),
            in_specs=in_specs,
            out_specs=pl.BlockSpec((tm, NO), lambda i: (i, 0)),
        ),
        compiler_params=pltpu.CompilerParams(dimension_semantics=("parallel",)),
    )(*inputs)
    return out[:, :nclass]


# --------------------------------------------------------------------------
# Parameter construction (deterministic, mirrors the PyTorch __init__)
# --------------------------------------------------------------------------
def init_linear(key, in_dim, out_dim, bias):
    stdv = 1.0 / math.sqrt(in_dim)
    # stored as [in, out] (transpose of torch's [out, in]); y = x @ W
    w = jax.random.uniform(key, (in_dim, out_dim), jnp.float32, -stdv, stdv)
    b = jnp.zeros((out_dim,), jnp.float32) if bias else None
    return w, b


def init_mlp2(key, in_dim, hidden, out_dim, bias):
    k1, k2 = jax.random.split(key)
    w1, b1 = init_linear(k1, in_dim, hidden, bias)
    w2, b2 = init_linear(k2, hidden, out_dim, bias)
    return dict(
        w1=w1, b1=b1, w2=w2, b2=b2,
        gamma=jnp.ones((hidden,), jnp.float32),
        beta=jnp.zeros((hidden,), jnp.float32),
        mean=jnp.zeros((hidden,), jnp.float32),
        var=jnp.ones((hidden,), jnp.float32),
        alpha=jnp.asarray(0.25, jnp.float32),   # PReLU default
    )


def make_params(key, cfg):
    ks = jax.random.split(key, 8 + len(cfg["label_keys"]))
    params = {}
    params["emb_x"] = {
        "P": init_mlp2(ks[0], 128, cfg["emb_dim"], cfg["emb_dim"], bias=False),
        "A": init_mlp2(ks[1], 256, cfg["emb_dim"], cfg["emb_dim"], bias=False),
    }
    params["emb_l"] = {
        k: init_mlp2(ks[2 + i], cfg["nclass"], cfg["emb_dim"], cfg["emb_dim"],
                     bias=False)
        for i, k in enumerate(cfg["label_keys"])
    }
    # lin_residue: xavier_uniform with gain('relu') = sqrt(2), no bias
    gain = math.sqrt(2.0)
    bound = gain * math.sqrt(6.0 / (128 + cfg["emb_dim"]))
    params["w_residue"] = jax.random.uniform(
        ks[6], (128, cfg["emb_dim"]), jnp.float32, -bound, bound)
    params["lin_x"] = init_mlp2(ks[4], cfg["emb_dim"], cfg["hidden_x"],
                                cfg["nclass"], bias=True)
    params["lin_l"] = init_mlp2(ks[5], cfg["nclass"], cfg["hidden_l"],
                                cfg["nclass"], bias=True)
    params["prelu_alpha"] = jnp.asarray(0.25, jnp.float32)
    # coefficient vectors (coe_init_x / coe_init_l)
    wx = np.zeros(cfg["coe_num"], np.float32)
    wx[0] = 1.0
    params["W_x"] = jnp.asarray(wx)
    nlk = len(cfg["label_keys"])
    params["W_l"] = jnp.full((nlk,), 1.0 / nlk, jnp.float32)
    return params


# --------------------------------------------------------------------------
# PSHGCN forward (eval mode) — three fused Pallas stages
# --------------------------------------------------------------------------
def pshgcn_forward(feats, label_feats, params, cfg):
    expander, label_keys = cfg["expander"], cfg["label_keys"]
    nclass = cfg["nclass"]

    M = feats["P"].shape[0]
    tm = min(TM_TARGET, _round_up(M, 8))
    Mpad = _round_up(M, tm)

    feats_p = {k: _pad_rows(v.astype(jnp.float32), Mpad) for k, v in feats.items()}
    lfeats_p = {k: _pad_rows(v.astype(jnp.float32), Mpad)
                for k, v in label_feats.items()}
    init_x = feats_p["P"]      # input_dropout == identity (eval)

    # fold BN(eval) into the first linear of every 2-layer MLP (host side)
    fx_emb = {t: _fold_mlp2(p) for t, p in params["emb_x"].items()}
    fl_emb = {k: _fold_mlp2(p) for k, p in params["emb_l"].items()}
    out_pad = _round_up(nclass, LANE)
    f_lin_x = _fold_mlp2(params["lin_x"], out_pad=out_pad)
    f_lin_l = _fold_mlp2(params["lin_l"], out_pad=out_pad)

    # stage A: per-metapath embeddings, label-MLP add fused into the epilogue
    emb = {}
    for k, v in feats_p.items():
        if k in label_keys:
            emb[k] = emb_apply(v, fx_emb[k[-1]], lfeats_p[k], fl_emb[k], tm=tm)
        else:
            emb[k] = emb_apply(v, fx_emb[k[-1]], tm=tm)

    # polynomial coefficients (scalar products, outside the kernel)
    W_x, W_l = params["W_x"], params["W_l"]
    terms = [emb["P"]]
    coefs = [W_x[0] * W_x[0]]
    for i in range(1, len(expander)):
        w1 = int(expander[i][:2]) - 10
        w2 = int(expander[i][2:4]) - 10
        coefs.append(W_x[w1] * W_x[w2])
        terms.append(emb[expander[i][4:]])

    # stage B: everything else in one fused kernel
    out = combine_apply(
        terms, jnp.stack(coefs), init_x,
        params["w_residue"].astype(jnp.bfloat16),
        [lfeats_p[k] for k in label_keys], W_l,
        f_lin_x, f_lin_l, params["prelu_alpha"], nclass, tm=tm)
    return out[:M]


# --------------------------------------------------------------------------
# Pure-JAX f32 reference (same eval semantics) for a sanity check
# --------------------------------------------------------------------------
def _ref_mlp2(x, p, eps=1e-5):
    h = x @ p["w1"] + (p["b1"] if p["b1"] is not None else 0.0)
    scale = p["gamma"] / jnp.sqrt(p["var"] + eps)
    h = h * scale + (p["beta"] - p["mean"] * scale)
    h = jnp.where(h > 0, h, p["alpha"] * h)
    return h @ p["w2"] + (p["b2"] if p["b2"] is not None else 0.0)


def ref_forward(feats, label_feats, params, cfg):
    expander, label_keys = cfg["expander"], cfg["label_keys"]
    init_x = feats["P"]
    emb = {k: _ref_mlp2(v, params["emb_x"][k[-1]]) for k, v in feats.items()}
    for k in list(emb.keys()):
        if k in label_keys:
            emb[k] = emb[k] + _ref_mlp2(label_feats[k], params["emb_l"][k])
    W_x, W_l = params["W_x"], params["W_l"]
    x = W_x[0] * W_x[0] * emb["P"]
    for i in range(1, len(expander)):
        w1 = int(expander[i][:2]) - 10
        w2 = int(expander[i][2:4]) - 10
        x = x + W_x[w1] * W_x[w2] * emb[expander[i][4:]]
    lx = W_l[0] * label_feats[label_keys[0]]
    for i in range(1, len(label_keys)):
        lx = lx + W_l[i] * label_feats[label_keys[i]]
    x = x + init_x @ params["w_residue"]
    a = params["prelu_alpha"]
    x = jnp.where(x > 0, x, a * x)
    x = _ref_mlp2(x, params["lin_x"])
    return x + _ref_mlp2(lx, params["lin_l"])


# --------------------------------------------------------------------------
if __name__ == "__main__":
    cfg = dict(
        emb_dim=128, hidden_x=128, hidden_l=64, nclass=16, coe_num=3,
        label_keys=["PP", "PAP"],
        expander=["1010P", "1011PP", "1112PA", "1212PAP"],
    )
    N = 256

    key = jax.random.PRNGKey(0)
    kp, kf1, kf2, kf3, kf4, kl1, kl2 = jax.random.split(key, 7)
    params = make_params(kp, cfg)

    # metapath features: key[-1] == 'P' -> 128 dims, key[-1] == 'A' -> 256 dims
    feats = {
        "P":   jax.random.normal(kf1, (N, 128), jnp.float32),
        "PP":  jax.random.normal(kf2, (N, 128), jnp.float32),
        "PAP": jax.random.normal(kf3, (N, 128), jnp.float32),
        "PA":  jax.random.normal(kf4, (N, 256), jnp.float32),
    }
    label_feats = {
        "PP":  jax.random.normal(kl1, (N, cfg["nclass"]), jnp.float32),
        "PAP": jax.random.normal(kl2, (N, cfg["nclass"]), jnp.float32),
    }

    out = pshgcn_forward(feats, label_feats, params, cfg)
    out = jax.block_until_ready(out)
    assert out.shape == (N, cfg["nclass"]), out.shape

    ref = jax.block_until_ready(ref_forward(feats, label_feats, params, cfg))
    # bf16 matmul operands / bf16 embedding intermediates vs a pure-f32
    # reference -> slightly looser tolerance than an all-f32 comparison.
    np.testing.assert_allclose(np.asarray(out), np.asarray(ref),
                               rtol=3e-2, atol=3e-2)
    print("KERNEL_OK")
</pallas_src>

<mosaic_0001>
module attributes {stable_mosaic.version = 11 : i64} {
  func.func @_emb_kernel(%arg0: i32, %arg1: memref<256x128xf32, #tpu.memory_space<vmem>>, %arg2: memref<128x128xbf16, #tpu.memory_space<vmem>>, %arg3: memref<1x128xf32, #tpu.memory_space<vmem>>, %arg4: memref<128x128xbf16, #tpu.memory_space<vmem>>, %arg5: memref<1x128xf32, #tpu.memory_space<vmem>>, %arg6: memref<1xf32, #tpu.memory_space<smem>>, %arg7: memref<256x128xbf16, #tpu.memory_space<vmem>>) attributes {dimension_semantics = [#tpu.dimension_semantics<parallel>], iteration_bounds = array<i64: 1>, scalar_prefetch = 0 : i64, scratch_operands = 0 : i64, tpu.core_type = #tpu.core_type<tc>, window_params = [{transform_indices = @transform_0, window_bounds = array<i64: 256, 128>}, {pipeline_mode = #tpu.pipeline_mode<synchronous>, transform_indices = @transform_1, window_bounds = array<i64: 128, 128>}, {pipeline_mode = #tpu.pipeline_mode<synchronous>, transform_indices = @transform_2, window_bounds = array<i64: 1, 128>}, {pipeline_mode = #tpu.pipeline_mode<synchronous>, transform_indices = @transform_3, window_bounds = array<i64: 128, 128>}, {pipeline_mode = #tpu.pipeline_mode<synchronous>, transform_indices = @transform_4, window_bounds = array<i64: 1, 128>}, {transform_indices = @transform_5, window_bounds = array<i64: 1>}, {transform_indices = @transform_6, window_bounds = array<i64: 256, 128>}]} {
    %c0 = arith.constant 0 : index
    %c0_0 = arith.constant 0 : index
    %0 = vector.load %arg1[%c0, %c0_0] : memref<256x128xf32, #tpu.memory_space<vmem>>, vector<256x128xf32>
    %c0_1 = arith.constant 0 : index
    %1 = memref.load %arg6[%c0_1] : memref<1xf32, #tpu.memory_space<smem>>
    %2 = arith.truncf %0 : vector<256x128xf32> to vector<256x128xbf16>
    %c0_2 = arith.constant 0 : index
    %c0_3 = arith.constant 0 : index
    %3 = vector.load %arg2[%c0_2, %c0_3] : memref<128x128xbf16, #tpu.memory_space<vmem>>, vector<128x128xbf16>
    %cst = arith.constant dense<0.000000e+00> : vector<256x128xf32>
    %4 = tpu.matmul %2, %3, %cst {dimension_numbers = #tpu.dot_dimension_numbers<[1], [0], [0], [1], [0, 0, 1, 1], [], []>} : vector<256x128xbf16>, vector<128x128xbf16>, vector<256x128xf32> -> vector<256x128xf32>
    %c0_4 = arith.constant 0 : index
    %c0_5 = arith.constant 0 : index
    %5 = vector.load %arg3[%c0_4, %c0_5] : memref<1x128xf32, #tpu.memory_space<vmem>>, vector<1x128xf32>
    %6 = vector.broadcast %5 : vector<1x128xf32> to vector<256x128xf32>
    %7 = arith.addf %4, %6 : vector<256x128xf32>
    %cst_6 = arith.constant 0.000000e+00 : f32
    %8 = vector.broadcast %cst_6 : f32 to vector<256x128xf32>
    %9 = arith.cmpf ogt, %7, %8 : vector<256x128xf32>
    %10 = vector.broadcast %1 : f32 to vector<256x128xf32>
    %11 = arith.mulf %10, %7 : vector<256x128xf32>
    %12 = arith.select %9, %7, %11 : vector<256x128xi1>, vector<256x128xf32>
    %13 = arith.truncf %12 : vector<256x128xf32> to vector<256x128xbf16>
    %c0_7 = arith.constant 0 : index
    %c0_8 = arith.constant 0 : index
    %14 = vector.load %arg4[%c0_7, %c0_8] : memref<128x128xbf16, #tpu.memory_space<vmem>>, vector<128x128xbf16>
    %cst_9 = arith.constant dense<0.000000e+00> : vector<256x128xf32>
    %15 = tpu.matmul %13, %14, %cst_9 {dimension_numbers = #tpu.dot_dimension_numbers<[1], [0], [0], [1], [0, 0, 1, 1], [], []>} : vector<256x128xbf16>, vector<128x128xbf16>, vector<256x128xf32> -> vector<256x128xf32>
    %c0_10 = arith.constant 0 : index
    %c0_11 = arith.constant 0 : index
    %16 = vector.load %arg5[%c0_10, %c0_11] : memref<1x128xf32, #tpu.memory_space<vmem>>, vector<1x128xf32>
    %17 = vector.broadcast %16 : vector<1x128xf32> to vector<256x128xf32>
    %18 = arith.addf %15, %17 : vector<256x128xf32>
    %19 = arith.truncf %18 : vector<256x128xf32> to vector<256x128xbf16>
    %c0_12 = arith.constant 0 : index
    %c0_13 = arith.constant 0 : index
    %20 = vector.load %arg7[%c0_12, %c0_13] : memref<256x128xbf16, #tpu.memory_space<vmem>>, vector<256x128xbf16>
    tpu.vector_store %arg7[%c0_12, %c0_13], %19 {strides = array<i32>} : memref<256x128xbf16, #tpu.memory_space<vmem>>, vector<256x128xbf16>,
    return
  }
  func.func @transform_0(%arg0: i32) -> (i32, i32) {
    %c0_i32 = arith.constant 0 : i32
    %c0_i32_0 = arith.constant 0 : i32
    return %arg0, %c0_i32 : i32, i32
  }
  func.func @transform_1(%arg0: i32) -> (i32, i32) {
    %c0_i32 = arith.constant 0 : i32
    %c0_i32_0 = arith.constant 0 : i32
    %c0_i32_1 = arith.constant 0 : i32
    return %c0_i32, %c0_i32_0 : i32, i32
  }
  func.func @transform_2(%arg0: i32) -> (i32, i32) {
    %c0_i32 = arith.constant 0 : i32
    %c0_i32_0 = arith.constant 0 : i32
    %c0_i32_1 = arith.constant 0 : i32
    return %c0_i32, %c0_i32_0 : i32, i32
  }
  func.func @transform_3(%arg0: i32) -> (i32, i32) {
    %c0_i32 = arith.constant 0 : i32
    %c0_i32_0 = arith.constant 0 : i32
    %c0_i32_1 = arith.constant 0 : i32
    return %c0_i32, %c0_i32_0 : i32, i32
  }
  func.func @transform_4(%arg0: i32) -> (i32, i32) {
    %c0_i32 = arith.constant 0 : i32
    %c0_i32_0 = arith.constant 0 : i32
    %c0_i32_1 = arith.constant 0 : i32
    return %c0_i32, %c0_i32_0 : i32, i32
  }
  func.func @transform_5(%arg0: i32) -> i32 {
    %c0_i32 = arith.constant 0 : i32
    %c0_i32_0 = arith.constant 0 : i32
    return %c0_i32 : i32
  }
  func.func @transform_6(%arg0: i32) -> (i32, i32) {
    %c0_i32 = arith.constant 0 : i32
    %c0_i32_0 = arith.constant 0 : i32
    return %arg0, %c0_i32 : i32, i32
  }
}

</mosaic_0001>

<llo_original>
// kernel: tpu_custom_call.1
$region0: #{tpu_custom_call.1}
  #allocation0 [shape = 'u32[]', space=smem, size = 0x4, offset = 0x4, fixed_abs, tag = 'smem constant byte address 0x4 - core index']
  #allocation1 [shape = 'u32[72,128]{1,0:T(1,128)}', space=vmem, size = 0x9000, scoped, tag = 'internal scratch']
  #allocation2 [shape = 'f32[1]{0:T(128)S(6)}', space=smem, size = 0x200, scoped, tag = 'scoped memory for tpu_custom_call.1']
  %s0 = inlined_call_operand.hbm [shape: f32[256,128], index: 0, kind: input, shape index: {}]
  %s1 = inlined_call_operand.hbm [shape: bf16[128,128], index: 1, kind: input, shape index: {}]
  %s2 = inlined_call_operand.vmem [shape: f32[1,128], index: 2, kind: input, shape index: {}]
  %s3 = inlined_call_operand.hbm [shape: bf16[128,128], index: 3, kind: input, shape index: {}]
  %s4 = inlined_call_operand.vmem [shape: f32[1,128], index: 4, kind: input, shape index: {}]
  %s5 = inlined_call_operand.<no memory space> [shape: f32[1], index: 5, kind: input, shape index: {}]
  %s6 = inlined_call_operand.hbm [shape: bf16[256,128], index: 6, kind: output, shape index: {}]
  %s7 = sld [smem:[#allocation0]]
  $region46: #{tpu_custom_call.1} parent=0
    _
  %s9 = ssub.s32 1, %s7
  %s10 = scalar_select 0, %s9, %s7
  %11 = sst [smem:[#allocation2]] %s5
  $region1: #{tpu_custom_call.1} parent=0
    #allocation3 [shape = 'u8[131072]{0}', space=vmem, size = 0x20000, scoped, tag = 'input window, operand 0, single buffered']
    #allocation4 [shape = 's32[1]{0}', space=sflag, size = 0x4, scoped, tag = 'scoped memory for tpu_custom_call.1']
    #allocation5 [shape = 's32[1]{0}', space=sflag, size = 0x4, scoped, tag = 'scoped memory for tpu_custom_call.1']
    #allocation6 [shape = 'u8[32768]{0}', space=vmem, size = 0x8000, scoped, tag = 'input window, operand 1, single buffered']
    #allocation7 [shape = 's32[1]{0}', space=sflag, size = 0x4, scoped, tag = 'scoped memory for tpu_custom_call.1']
    #allocation8 [shape = 'u8[32768]{0}', space=vmem, size = 0x8000, scoped, tag = 'input window, operand 3, single buffered']
    #allocation9 [shape = 'u8[65536]{0}', space=vmem, size = 0x10000, scoped, tag = 'output window, operand 0, single buffered']
    %12 = vsyncpa [#allocation4], 0
    %13 = vsyncpa [#allocation7], 0
    %14 = vsyncpa [#allocation5], 0
    // Predicated region
    $region2: #{tpu_custom_call.1} parent=1 // pred_check
      _
    $region3: #{tpu_custom_call.1} parent=1 // pred_check_branch
      %16 = sbr.rel (0) target = $region5
    $region4: #{tpu_custom_call.1} parent=1 // pred_region
      %18 = vsyncadd [#allocation4], 0
      %s19 = sshll.u32 %s0, 4
      %s20 = int_to_ptr.hbm [resolvable:$true] %s19
      %s21 = sshll.u32 [#allocation3], 4
      %s22 = int_to_ptr.vmem [resolvable:$true] %s21
      %27 = dma.hbm_to_vmem [thread:$0]  %s20, 4096, %s22, [#allocation4], 128, 128, 8
    $region5: #{tpu_custom_call.1} parent=1 // pred_fallthru
      _
    // Predicated region
    $region6: #{tpu_custom_call.1} parent=1 // pred_check
      _
    $region7: #{tpu_custom_call.1} parent=1 // pred_check_branch
      %29 = sbr.rel (0) target = $region9
    $region8: #{tpu_custom_call.1} parent=1 // pred_region
      %31 = vsyncadd [#allocation7], 0
      %s32 = sshll.u32 %s1, 4
      %s33 = int_to_ptr.hbm [resolvable:$true] %s32
      %s34 = sshll.u32 [#allocation6], 4
      %s35 = int_to_ptr.vmem [resolvable:$true] %s34
      %40 = dma.hbm_to_vmem [thread:$0]  %s33, 1024, %s35, [#allocation7], 64, 64, 4
    $region9: #{tpu_custom_call.1} parent=1 // pred_fallthru
      _
    // Predicated region
    $region10: #{tpu_custom_call.1} parent=1 // pred_check
      _
    $region11: #{tpu_custom_call.1} parent=1 // pred_check_branch
      %42 = sbr.rel (0) target = $region13
    $region12: #{tpu_custom_call.1} parent=1 // pred_region
      _
    $region13: #{tpu_custom_call.1} parent=1 // pred_fallthru
      _
    // Predicated region
    $region14: #{tpu_custom_call.1} parent=1 // pred_check
      _
    $region15: #{tpu_custom_call.1} parent=1 // pred_check_branch
      %44 = sbr.rel (0) target = $region17
    $region16: #{tpu_custom_call.1} parent=1 // pred_region
      %46 = vsyncadd [#allocation7], 0
      %s47 = sshll.u32 %s3, 4
      %s48 = int_to_ptr.hbm [resolvable:$true] %s47
      %s49 = sshll.u32 [#allocation8], 4
      %s50 = int_to_ptr.vmem [resolvable:$true] %s49
      %55 = dma.hbm_to_vmem [thread:$0]  %s48, 1024, %s50, [#allocation7], 64, 64, 4
    $region17: #{tpu_custom_call.1} parent=1 // pred_fallthru
      _
    // Predicated region
    $region18: #{tpu_custom_call.1} parent=1 // pred_check
      _
    $region19: #{tpu_custom_call.1} parent=1 // pred_check_branch
      %57 = sbr.rel (0) target = $region21
    $region20: #{tpu_custom_call.1} parent=1 // pred_region
      _
    $region21: #{tpu_custom_call.1} parent=1 // pred_fallthru
      _
    // Predicated region
    $region22: #{tpu_custom_call.1} parent=1 // pred_check
      _
    $region23: #{tpu_custom_call.1} parent=1 // pred_check_branch
      %59 = sbr.rel (0) target = $region25
    $region24: #{tpu_custom_call.1} parent=1 // pred_region
      _
    $region25: #{tpu_custom_call.1} parent=1 // pred_fallthru
      _
    // Predicated region
    $region26: #{tpu_custom_call.1} parent=1 // pred_check
      _
    $region27: #{tpu_custom_call.1} parent=1 // pred_check_branch
      %61 = sbr.rel (0) target = $region29
    $region28: #{tpu_custom_call.1} parent=1 // pred_region
      %63 = dma.done [#allocation4], 4096
    $region29: #{tpu_custom_call.1} parent=1 // pred_fallthru
      _
    // Predicated region
    $region30: #{tpu_custom_call.1} parent=1 // pred_check
      _
    $region31: #{tpu_custom_call.1} parent=1 // pred_check_branch
      %65 = sbr.rel (0) target = $region33
    $region32: #{tpu_custom_call.1} parent=1 // pred_region
      %67 = dma.done [#allocation7], 1024
    $region33: #{tpu_custom_call.1} parent=1 // pred_fallthru
      _
    // Predicated region
    $region34: #{tpu_custom_call.1} parent=1 // pred_check
      _
    $region35: #{tpu_custom_call.1} parent=1 // pred_check_branch
      %69 = sbr.rel (0) target = $region37
    $region36: #{tpu_custom_call.1} parent=1 // pred_region
      %71 = dma.done [#allocation7], 1024
    $region37: #{tpu_custom_call.1} parent=1 // pred_fallthru
      _
    %v72 = vld [vmem:[#allocation3] sm:$0xff]
    %v73 = vld [vmem:[#allocation3 + $0x8] sm:$0xff]
    %v74 = vld [vmem:[#allocation3 + $0x10] sm:$0xff]
    %v75 = vld [vmem:[#allocation3 + $0x18] sm:$0xff]
    %v76 = vld [vmem:[#allocation3 + $0x20] sm:$0xff]
    %v77 = vld [vmem:[#allocation3 + $0x28] sm:$0xff]
    %v78 = vld [vmem:[#allocation3 + $0x30] sm:$0xff]
    %v79 = vld [vmem:[#allocation3 + $0x38] sm:$0xff]
    %v80 = vld [vmem:[#allocation3 + $0x40] sm:$0xff]
    %v81 = vld [vmem:[#allocation3 + $0x48] sm:$0xff]
    %v82 = vld [vmem:[#allocation3 + $0x50] sm:$0xff]
    %v83 = vld [vmem:[#allocation3 + $0x58] sm:$0xff]
    %v84 = vld [vmem:[#allocation3 + $0x60] sm:$0xff]
    %v85 = vld [vmem:[#allocation3 + $0x68] sm:$0xff]
    %v86 = vld [vmem:[#allocation3 + $0x70] sm:$0xff]
    %v87 = vld [vmem:[#allocation3 + $0x78] sm:$0xff]
    %v88 = vld [vmem:[#allocation3 + $0x80] sm:$0xff]
    %v89 = vld [vmem:[#allocation3 + $0x88] sm:$0xff]
    %v90 = vld [vmem:[#allocation3 + $0x90] sm:$0xff]
    %v91 = vld [vmem:[#allocation3 + $0x98] sm:$0xff]
    %v92 = vld [vmem:[#allocation3 + $0xa0] sm:$0xff]
    %v93 = vld [vmem:[#allocation3 + $0xa8] sm:$0xff]
    %v94 = vld [vmem:[#allocation3 + $0xb0] sm:$0xff]
    %v95 = vld [vmem:[#allocation3 + $0xb8] sm:$0xff]
    %v96 = vld [vmem:[#allocation3 + $0xc0] sm:$0xff]
    %v97 = vld [vmem:[#allocation3 + $0xc8] sm:$0xff]
    %v98 = vld [vmem:[#allocation3 + $0xd0] sm:$0xff]
    %v99 = vld [vmem:[#allocation3 + $0xd8] sm:$0xff]
    %v100 = vld [vmem:[#allocation3 + $0xe0] sm:$0xff]
    %v101 = vld [vmem:[#allocation3 + $0xe8] sm:$0xff]
    %v102 = vld [vmem:[#allocation3 + $0xf0] sm:$0xff]
    %v103 = vld [vmem:[#allocation3 + $0xf8] sm:$0xff]
    %s104 = sld [smem:[#allocation2]]
    %v105 = vpack.c.bf16 %v73, %v72
    %v106 = vpack.c.bf16 %v75, %v74
    %v107 = vpack.c.bf16 %v77, %v76
    %v108 = vpack.c.bf16 %v79, %v78
    %v109 = vpack.c.bf16 %v81, %v80
    %v110 = vpack.c.bf16 %v83, %v82
    %v111 = vpack.c.bf16 %v85, %v84
    %v112 = vpack.c.bf16 %v87, %v86
    %v113 = vpack.c.bf16 %v89, %v88
    %v114 = vpack.c.bf16 %v91, %v90
    %v115 = vpack.c.bf16 %v93, %v92
    %v116 = vpack.c.bf16 %v95, %v94
    %v117 = vpack.c.bf16 %v97, %v96
    %v118 = vpack.c.bf16 %v99, %v98
    %v119 = vpack.c.bf16 %v101, %v100
    %v120 = vpack.c.bf16 %v103, %v102
    %v121 = vld [vmem:[#allocation6] sm:$0xf]
    %v122 = vld [vmem:[#allocation6 + $0x4] sm:$0xf]
    %v123 = vld [vmem:[#allocation6 + $0x8] sm:$0xf]
    %v124 = vld [vmem:[#allocation6 + $0xc] sm:$0xf]
    %v125 = vld [vmem:[#allocation6 + $0x10] sm:$0xf]
    %v126 = vld [vmem:[#allocation6 + $0x14] sm:$0xf]
    %v127 = vld [vmem:[#allocation6 + $0x18] sm:$0xf]
    %v128 = vld [vmem:[#allocation6 + $0x1c] sm:$0xf]
    %v129 = vld [vmem:[#allocation6 + $0x20] sm:$0xf]
    %v130 = vld [vmem:[#allocation6 + $0x24] sm:$0xf]
    %v131 = vld [vmem:[#allocation6 + $0x28] sm:$0xf]
    %v132 = vld [vmem:[#allocation6 + $0x2c] sm:$0xf]
    %v133 = vld [vmem:[#allocation6 + $0x30] sm:$0xf]
    %v134 = vld [vmem:[#allocation6 + $0x34] sm:$0xf]
    %v135 = vld [vmem:[#allocation6 + $0x38] sm:$0xf]
    %v136 = vld [vmem:[#allocation6 + $0x3c] sm:$0xf]
    %v137 = vld [vmem:[%s2] sm:$0x1]
    %v139 = vperm.slane %v137, 0
    %v157 = vunpack.c.l.b16 %v121
    %v158 = vunpack.c.l.b16 %v122
    %v159 = vunpack.c.l.b16 %v123
    %v160 = vunpack.c.l.b16 %v124
    %v161 = vunpack.c.l.b16 %v125
    %v162 = vunpack.c.l.b16 %v126
    %v163 = vunpack.c.l.b16 %v127
    %v164 = vunpack.c.l.b16 %v128
    %v165 = vunpack.c.l.b16 %v129
    %v166 = vunpack.c.l.b16 %v130
    %v167 = vunpack.c.l.b16 %v131
    %v168 = vunpack.c.l.b16 %v132
    %v169 = vunpack.c.l.b16 %v133
    %v170 = vunpack.c.l.b16 %v134
    %v171 = vunpack.c.l.b16 %v135
    %v172 = vunpack.c.l.b16 %v136
    %v173 = vpack.c.b16 %v158, %v157
    %v174 = vpack.c.b16 %v160, %v159
    %v175 = vpack.c.b16 %v162, %v161
    %v176 = vpack.c.b16 %v164, %v163
    %v177 = vpack.c.b16 %v166, %v165
    %v178 = vpack.c.b16 %v168, %v167
    %v179 = vpack.c.b16 %v170, %v169
    %v180 = vpack.c.b16 %v172, %v171
    %189 = vmatpush.bf16.msra.mxu0 %v180
    %190 = vmatpush.bf16.msra.mxu0 %v179
    %191 = vmatpush.bf16.msra.mxu0 %v178
    %192 = vmatpush.bf16.msra.mxu0 %v177
    %193 = vmatpush.bf16.msra.mxu0 %v176
    %194 = vmatpush.bf16.msra.mxu0 %v175
    %195 = vmatpush.bf16.msra.mxu0 %v174
    %196 = vmatpush.bf16.msra.mxu0 %v173
    %197 = vmatmul.bf16.gmra.mxu0 %v105
    %v198 = vpop.f32.mrf.mxu0
    %v199 = vadd.f32 %v139, %v198
    %v200 = vpop.f32.mrf.mxu0
    %v201 = vadd.f32 %v139, %v200
    %202 = vmatmul.bf16.gmra.mxu0 %v106
    %v203 = vpop.f32.mrf.mxu0
    %v204 = vadd.f32 %v139, %v203
    %v205 = vpop.f32.mrf.mxu0
    %v206 = vadd.f32 %v139, %v205
    %207 = vmatmul.bf16.gmra.mxu0 %v107
    %v208 = vpop.f32.mrf.mxu0
    %v209 = vadd.f32 %v139, %v208
    %v210 = vpop.f32.mrf.mxu0
    %v211 = vadd.f32 %v139, %v210
    %212 = vmatmul.bf16.gmra.mxu0 %v108
    %v213 = vpop.f32.mrf.mxu0
    %v214 = vadd.f32 %v139, %v213
    %v215 = vpop.f32.mrf.mxu0
    %v216 = vadd.f32 %v139, %v215
    %217 = vmatmul.bf16.gmra.mxu0 %v109
    %v218 = vpop.f32.mrf.mxu0
    %v219 = vadd.f32 %v139, %v218
    %v220 = vpop.f32.mrf.mxu0
    %v221 = vadd.f32 %v139, %v220
    %222 = vmatmul.bf16.gmra.mxu0 %v110
    %v223 = vpop.f32.mrf.mxu0
    %v224 = vadd.f32 %v139, %v223
    %v225 = vpop.f32.mrf.mxu0
    %v226 = vadd.f32 %v139, %v225
    %227 = vmatmul.bf16.gmra.mxu0 %v111
    %v228 = vpop.f32.mrf.mxu0
    %v229 = vadd.f32 %v139, %v228
    %v230 = vpop.f32.mrf.mxu0
    %v231 = vadd.f32 %v139, %v230
    %232 = vmatmul.bf16.gmra.mxu0 %v112
    %v233 = vpop.f32.mrf.mxu0
    %v234 = vadd.f32 %v139, %v233
    %v235 = vpop.f32.mrf.mxu0
    %v236 = vadd.f32 %v139, %v235
    %237 = vmatmul.bf16.gmra.mxu0 %v113
    %v238 = vpop.f32.mrf.mxu0
    %v239 = vadd.f32 %v139, %v238
    %v240 = vpop.f32.mrf.mxu0
    %v241 = vadd.f32 %v139, %v240
    %242 = vmatmul.bf16.gmra.mxu0 %v114
    %v243 = vpop.f32.mrf.mxu0
    %v244 = vadd.f32 %v139, %v243
    %v245 = vpop.f32.mrf.mxu0
    %v246 = vadd.f32 %v139, %v245
    %247 = vmatmul.bf16.gmra.mxu0 %v115
    %v248 = vpop.f32.mrf.mxu0
    %v249 = vadd.f32 %v139, %v248
    %v250 = vpop.f32.mrf.mxu0
    %v251 = vadd.f32 %v139, %v250
    %252 = vmatmul.bf16.gmra.mxu0 %v116
    %v253 = vpop.f32.mrf.mxu0
    %v254 = vadd.f32 %v139, %v253
    %v255 = vpop.f32.mrf.mxu0
    %v256 = vadd.f32 %v139, %v255
    %257 = vmatmul.bf16.gmra.mxu0 %v117
    %v258 = vpop.f32.mrf.mxu0
    %v259 = vadd.f32 %v139, %v258
    %v260 = vpop.f32.mrf.mxu0
    %v261 = vadd.f32 %v139, %v260
    %262 = vmatmul.bf16.gmra.mxu0 %v118
    %v263 = vpop.f32.mrf.mxu0
    %v264 = vadd.f32 %v139, %v263
    %v265 = vpop.f32.mrf.mxu0
    %v266 = vadd.f32 %v139, %v265
    %267 = vmatmul.bf16.gmra.mxu0 %v119
    %v268 = vpop.f32.mrf.mxu0
    %v269 = vadd.f32 %v139, %v268
    %v270 = vpop.f32.mrf.mxu0
    %v271 = vadd.f32 %v139, %v270
    %272 = vmatmul.bf16.gmra.mxu0 %v120
    %v273 = vpop.f32.mrf.mxu0
    %v274 = vadd.f32 %v139, %v273
    %v275 = vpop.f32.mrf.mxu0
    %v276 = vadd.f32 %v139, %v275
    %277 = vdwg.mxu0
    %vm278 = vcmp.gt.f32.partialorder %v199, 0.0
    %vm279 = vcmp.gt.f32.partialorder %v201, 0.0
    %vm280 = vcmp.gt.f32.partialorder %v204, 0.0
    %vm281 = vcmp.gt.f32.partialorder %v206, 0.0
    %vm282 = vcmp.gt.f32.partialorder %v209, 0.0
    %vm283 = vcmp.gt.f32.partialorder %v211, 0.0
    %vm284 = vcmp.gt.f32.partialorder %v214, 0.0
    %vm285 = vcmp.gt.f32.partialorder %v216, 0.0
    %vm286 = vcmp.gt.f32.partialorder %v219, 0.0
    %vm287 = vcmp.gt.f32.partialorder %v221, 0.0
    %vm288 = vcmp.gt.f32.partialorder %v224, 0.0
    %vm289 = vcmp.gt.f32.partialorder %v226, 0.0
    %vm290 = vcmp.gt.f32.partialorder %v229, 0.0
    %vm291 = vcmp.gt.f32.partialorder %v231, 0.0
    %vm292 = vcmp.gt.f32.partialorder %v234, 0.0
    %vm293 = vcmp.gt.f32.partialorder %v236, 0.0
    %vm294 = vcmp.gt.f32.partialorder %v239, 0.0
    %vm295 = vcmp.gt.f32.partialorder %v241, 0.0
    %vm296 = vcmp.gt.f32.partialorder %v244, 0.0
    %vm297 = vcmp.gt.f32.partialorder %v246, 0.0
    %vm298 = vcmp.gt.f32.partialorder %v249, 0.0
    %vm299 = vcmp.gt.f32.partialorder %v251, 0.0
    %vm300 = vcmp.gt.f32.partialorder %v254, 0.0
    %vm301 = vcmp.gt.f32.partialorder %v256, 0.0
    %vm302 = vcmp.gt.f32.partialorder %v259, 0.0
    %vm303 = vcmp.gt.f32.partialorder %v261, 0.0
    %vm304 = vcmp.gt.f32.partialorder %v264, 0.0
    %vm305 = vcmp.gt.f32.partialorder %v266, 0.0
    %vm306 = vcmp.gt.f32.partialorder %v269, 0.0
    %vm307 = vcmp.gt.f32.partialorder %v271, 0.0
    %vm308 = vcmp.gt.f32.partialorder %v274, 0.0
    %vm309 = vcmp.gt.f32.partialorder %v276, 0.0
    %v310 = vstv %s104
    %v311 = vmul.f32 %v310, %v199
    %v312 = vmul.f32 %v310, %v201
    %v313 = vmul.f32 %v310, %v204
    %v314 = vmul.f32 %v310, %v206
    %v315 = vmul.f32 %v310, %v209
    %v316 = vmul.f32 %v310, %v211
    %v317 = vmul.f32 %v310, %v214
    %v318 = vmul.f32 %v310, %v216
    %v319 = vmul.f32 %v310, %v219
    %v320 = vmul.f32 %v310, %v221
    %v321 = vmul.f32 %v310, %v224
    %v322 = vmul.f32 %v310, %v226
    %v323 = vmul.f32 %v310, %v229
    %v324 = vmul.f32 %v310, %v231
    %v325 = vmul.f32 %v310, %v234
    %v326 = vmul.f32 %v310, %v236
    %v327 = vmul.f32 %v310, %v239
    %v328 = vmul.f32 %v310, %v241
    %v329 = vmul.f32 %v310, %v244
    %v330 = vmul.f32 %v310, %v246
    %v331 = vmul.f32 %v310, %v249
    %v332 = vmul.f32 %v310, %v251
    %v333 = vmul.f32 %v310, %v254
    %v334 = vmul.f32 %v310, %v256
    %v335 = vmul.f32 %v310, %v259
    %v336 = vmul.f32 %v310, %v261
    %v337 = vmul.f32 %v310, %v264
    %v338 = vmul.f32 %v310, %v266
    %v339 = vmul.f32 %v310, %v269
    %v340 = vmul.f32 %v310, %v271
    %v341 = vmul.f32 %v310, %v274
    %v342 = vmul.f32 %v310, %v276
    %v343 = vsel %vm278, %v199, %v311
    %v344 = vsel %vm279, %v201, %v312
    %v345 = vsel %vm280, %v204, %v313
    %v346 = vsel %vm281, %v206, %v314
    %v347 = vsel %vm282, %v209, %v315
    %v348 = vsel %vm283, %v211, %v316
    %v349 = vsel %vm284, %v214, %v317
    %v350 = vsel %vm285, %v216, %v318
    %v351 = vsel %vm286, %v219, %v319
    %v352 = vsel %vm287, %v221, %v320
    %v353 = vsel %vm288, %v224, %v321
    %v354 = vsel %vm289, %v226, %v322
    %v355 = vsel %vm290, %v229, %v323
    %v356 = vsel %vm291, %v231, %v324
    %v357 = vsel %vm292, %v234, %v325
    %v358 = vsel %vm293, %v236, %v326
    %v359 = vsel %vm294, %v239, %v327
    %v360 = vsel %vm295, %v241, %v328
    %v361 = vsel %vm296, %v244, %v329
    %v362 = vsel %vm297, %v246, %v330
    %v363 = vsel %vm298, %v249, %v331
    %v364 = vsel %vm299, %v251, %v332
    %v365 = vsel %vm300, %v254, %v333
    %v366 = vsel %vm301, %v256, %v334
    %v367 = vsel %vm302, %v259, %v335
    %v368 = vsel %vm303, %v261, %v336
    %v369 = vsel %vm304, %v264, %v337
    %v370 = vsel %vm305, %v266, %v338
    %v371 = vsel %vm306, %v269, %v339
    %v372 = vsel %vm307, %v271, %v340
    %v373 = vsel %vm308, %v274, %v341
    %v374 = vsel %vm309, %v276, %v342
    %v375 = vpack.c.bf16 %v344, %v343
    %v376 = vpack.c.bf16 %v346, %v345
    %v377 = vpack.c.bf16 %v348, %v347
    %v378 = vpack.c.bf16 %v350, %v349
    %v379 = vpack.c.bf16 %v352, %v351
    %v380 = vpack.c.bf16 %v354, %v353
    %v381 = vpack.c.bf16 %v356, %v355
    %v382 = vpack.c.bf16 %v358, %v357
    %v383 = vpack.c.bf16 %v360, %v359
    %v384 = vpack.c.bf16 %v362, %v361
    %v385 = vpack.c.bf16 %v364, %v363
    %v386 = vpack.c.bf16 %v366, %v365
    %v387 = vpack.c.bf16 %v368, %v367
    %v388 = vpack.c.bf16 %v370, %v369
    %v389 = vpack.c.bf16 %v372, %v371
    %v390 = vpack.c.bf16 %v374, %v373
    %v391 = vld [vmem:[#allocation8] sm:$0xf]
    %v392 = vld [vmem:[#allocation8 + $0x4] sm:$0xf]
    %v393 = vld [vmem:[#allocation8 + $0x8] sm:$0xf]
    %v394 = vld [vmem:[#allocation8 + $0xc] sm:$0xf]
    %v395 = vld [vmem:[#allocation8 + $0x10] sm:$0xf]
    %v396 = vld [vmem:[#allocation8 + $0x14] sm:$0xf]
    %v397 = vld [vmem:[#allocation8 + $0x18] sm:$0xf]
    %v398 = vld [vmem:[#allocation8 + $0x1c] sm:$0xf]
    %v399 = vld [vmem:[#allocation8 + $0x20] sm:$0xf]
    %v400 = vld [vmem:[#allocation8 + $0x24] sm:$0xf]
    %v401 = vld [vmem:[#allocation8 + $0x28] sm:$0xf]
    %v402 = vld [vmem:[#allocation8 + $0x2c] sm:$0xf]
    %v403 = vld [vmem:[#allocation8 + $0x30] sm:$0xf]
    %v404 = vld [vmem:[#allocation8 + $0x34] sm:$0xf]
    %v405 = vld [vmem:[#allocation8 + $0x38] sm:$0xf]
    %v406 = vld [vmem:[#allocation8 + $0x3c] sm:$0xf]
    %v407 = vld [vmem:[%s4] sm:$0x1]
    %v409 = vperm.slane %v407, 0
    %v427 = vunpack.c.l.b16 %v391
    %v428 = vunpack.c.l.b16 %v392
    %v429 = vunpack.c.l.b16 %v393
    %v430 = vunpack.c.l.b16 %v394
    %v431 = vunpack.c.l.b16 %v395
    %v432 = vunpack.c.l.b16 %v396
    %v433 = vunpack.c.l.b16 %v397
    %v434 = vunpack.c.l.b16 %v398
    %v435 = vunpack.c.l.b16 %v399
    %v436 = vunpack.c.l.b16 %v400
    %v437 = vunpack.c.l.b16 %v401
    %v438 = vunpack.c.l.b16 %v402
    %v439 = vunpack.c.l.b16 %v403
    %v440 = vunpack.c.l.b16 %v404
    %v441 = vunpack.c.l.b16 %v405
    %v442 = vunpack.c.l.b16 %v406
    %v443 = vpack.c.b16 %v428, %v427
    %v444 = vpack.c.b16 %v430, %v429
    %v445 = vpack.c.b16 %v432, %v431
    %v446 = vpack.c.b16 %v434, %v433
    %v447 = vpack.c.b16 %v436, %v435
    %v448 = vpack.c.b16 %v438, %v437
    %v449 = vpack.c.b16 %v440, %v439
    %v450 = vpack.c.b16 %v442, %v441
    %459 = vmatpush.bf16.msra.mxu0 %v450
    %460 = vmatpush.bf16.msra.mxu0 %v449
    %461 = vmatpush.bf16.msra.mxu0 %v448
    %462 = vmatpush.bf16.msra.mxu0 %v447
    %463 = vmatpush.bf16.msra.mxu0 %v446
    %464 = vmatpush.bf16.msra.mxu0 %v445
    %465 = vmatpush.bf16.msra.mxu0 %v444
    %466 = vmatpush.bf16.msra.mxu0 %v443
    %467 = vmatmul.bf16.gmra.mxu0 %v375
    %v468 = vpop.f32.mrf.mxu0
    %v469 = vadd.f32 %v409, %v468
    %v470 = vpop.f32.mrf.mxu0
    %v471 = vadd.f32 %v409, %v470
    %472 = vmatmul.bf16.gmra.mxu0 %v376
    %v473 = vpop.f32.mrf.mxu0
    %v474 = vadd.f32 %v409, %v473
    %v475 = vpop.f32.mrf.mxu0
    %v476 = vadd.f32 %v409, %v475
    %477 = vmatmul.bf16.gmra.mxu0 %v377
    %v478 = vpop.f32.mrf.mxu0
    %v479 = vadd.f32 %v409, %v478
    %v480 = vpop.f32.mrf.mxu0
    %v481 = vadd.f32 %v409, %v480
    %482 = vmatmul.bf16.gmra.mxu0 %v378
    %v483 = vpop.f32.mrf.mxu0
    %v484 = vadd.f32 %v409, %v483
    %v485 = vpop.f32.mrf.mxu0
    %v486 = vadd.f32 %v409, %v485
    %487 = vmatmul.bf16.gmra.mxu0 %v379
    %v488 = vpop.f32.mrf.mxu0
    %v489 = vadd.f32 %v409, %v488
    %v490 = vpop.f32.mrf.mxu0
    %v491 = vadd.f32 %v409, %v490
    %492 = vmatmul.bf16.gmra.mxu0 %v380
    %v493 = vpop.f32.mrf.mxu0
    %v494 = vadd.f32 %v409, %v493
    %v495 = vpop.f32.mrf.mxu0
    %v496 = vadd.f32 %v409, %v495
    %497 = vmatmul.bf16.gmra.mxu0 %v381
    %v498 = vpop.f32.mrf.mxu0
    %v499 = vadd.f32 %v409, %v498
    %v500 = vpop.f32.mrf.mxu0
    %v501 = vadd.f32 %v409, %v500
    %502 = vmatmul.bf16.gmra.mxu0 %v382
    %v503 = vpop.f32.mrf.mxu0
    %v504 = vadd.f32 %v409, %v503
    %v505 = vpop.f32.mrf.mxu0
    %v506 = vadd.f32 %v409, %v505
    %507 = vmatmul.bf16.gmra.mxu0 %v383
    %v508 = vpop.f32.mrf.mxu0
    %v509 = vadd.f32 %v409, %v508
    %v510 = vpop.f32.mrf.mxu0
    %v511 = vadd.f32 %v409, %v510
    %512 = vmatmul.bf16.gmra.mxu0 %v384
    %v513 = vpop.f32.mrf.mxu0
    %v514 = vadd.f32 %v409, %v513
    %v515 = vpop.f32.mrf.mxu0
    %v516 = vadd.f32 %v409, %v515
    %517 = vmatmul.bf16.gmra.mxu0 %v385
    %v518 = vpop.f32.mrf.mxu0
    %v519 = vadd.f32 %v409, %v518
    %v520 = vpop.f32.mrf.mxu0
    %v521 = vadd.f32 %v409, %v520
    %522 = vmatmul.bf16.gmra.mxu0 %v386
    %v523 = vpop.f32.mrf.mxu0
    %v524 = vadd.f32 %v409, %v523
    %v525 = vpop.f32.mrf.mxu0
    %v526 = vadd.f32 %v409, %v525
    %527 = vmatmul.bf16.gmra.mxu0 %v387
    %v528 = vpop.f32.mrf.mxu0
    %v529 = vadd.f32 %v409, %v528
    %v530 = vpop.f32.mrf.mxu0
    %v531 = vadd.f32 %v409, %v530
    %532 = vmatmul.bf16.gmra.mxu0 %v388
    %v533 = vpop.f32.mrf.mxu0
    %v534 = vadd.f32 %v409, %v533
    %v535 = vpop.f32.mrf.mxu0
    %v536 = vadd.f32 %v409, %v535
    %537 = vmatmul.bf16.gmra.mxu0 %v389
    %v538 = vpop.f32.mrf.mxu0
    %v539 = vadd.f32 %v409, %v538
    %v540 = vpop.f32.mrf.mxu0
    %v541 = vadd.f32 %v409, %v540
    %542 = vmatmul.bf16.gmra.mxu0 %v390
    %v543 = vpop.f32.mrf.mxu0
    %v544 = vadd.f32 %v409, %v543
    %v545 = vpop.f32.mrf.mxu0
    %v546 = vadd.f32 %v409, %v545
    %547 = vdwg.mxu0
    %v548 = vpack.c.bf16 %v469, %v469
    %v549 = vpack.c.bf16 %v471, %v471
    %v550 = vpack.c.bf16 %v474, %v474
    %v551 = vpack.c.bf16 %v476, %v476
    %v552 = vpack.c.bf16 %v479, %v479
    %v553 = vpack.c.bf16 %v481, %v481
    %v554 = vpack.c.bf16 %v484, %v484
    %v555 = vpack.c.bf16 %v486, %v486
    %v556 = vpack.c.bf16 %v489, %v489
    %v557 = vpack.c.bf16 %v491, %v491
    %v558 = vpack.c.bf16 %v494, %v494
    %v559 = vpack.c.bf16 %v496, %v496
    %v560 = vpack.c.bf16 %v499, %v499
    %v561 = vpack.c.bf16 %v501, %v501
    %v562 = vpack.c.bf16 %v504, %v504
    %v563 = vpack.c.bf16 %v506, %v506
    %v564 = vpack.c.bf16 %v509, %v509
    %v565 = vpack.c.bf16 %v511, %v511
    %v566 = vpack.c.bf16 %v514, %v514
    %v567 = vpack.c.bf16 %v516, %v516
    %v568 = vpack.c.bf16 %v519, %v519
    %v569 = vpack.c.bf16 %v521, %v521
    %v570 = vpack.c.bf16 %v524, %v524
    %v571 = vpack.c.bf16 %v526, %v526
    %v572 = vpack.c.bf16 %v529, %v529
    %v573 = vpack.c.bf16 %v531, %v531
    %v574 = vpack.c.bf16 %v534, %v534
    %v575 = vpack.c.bf16 %v536, %v536
    %v576 = vpack.c.bf16 %v539, %v539
    %v577 = vpack.c.bf16 %v541, %v541
    %v578 = vpack.c.bf16 %v544, %v544
    %v579 = vpack.c.bf16 %v546, %v546
    %580 = vst [vmem:[#allocation9] sm:$0xf] %v548
    %581 = vst [vmem:[#allocation9 + $0x4] sm:$0xf] %v549
    %582 = vst [vmem:[#allocation9 + $0x8] sm:$0xf] %v550
    %583 = vst [vmem:[#allocation9 + $0xc] sm:$0xf] %v551
    %584 = vst [vmem:[#allocation9 + $0x10] sm:$0xf] %v552
    %585 = vst [vmem:[#allocation9 + $0x14] sm:$0xf] %v553
    %586 = vst [vmem:[#allocation9 + $0x18] sm:$0xf] %v554
    %587 = vst [vmem:[#allocation9 + $0x1c] sm:$0xf] %v555
    %588 = vst [vmem:[#allocation9 + $0x20] sm:$0xf] %v556
    %589 = vst [vmem:[#allocation9 + $0x24] sm:$0xf] %v557
    %590 = vst [vmem:[#allocation9 + $0x28] sm:$0xf] %v558
    %591 = vst [vmem:[#allocation9 + $0x2c] sm:$0xf] %v559
    %592 = vst [vmem:[#allocation9 + $0x30] sm:$0xf] %v560
    %593 = vst [vmem:[#allocation9 + $0x34] sm:$0xf] %v561
    %594 = vst [vmem:[#allocation9 + $0x38] sm:$0xf] %v562
    %595 = vst [vmem:[#allocation9 + $0x3c] sm:$0xf] %v563
    %596 = vst [vmem:[#allocation9 + $0x40] sm:$0xf] %v564
    %597 = vst [vmem:[#allocation9 + $0x44] sm:$0xf] %v565
    %598 = vst [vmem:[#allocation9 + $0x48] sm:$0xf] %v566
    %599 = vst [vmem:[#allocation9 + $0x4c] sm:$0xf] %v567
    %600 = vst [vmem:[#allocation9 + $0x50] sm:$0xf] %v568
    %601 = vst [vmem:[#allocation9 + $0x54] sm:$0xf] %v569
    %602 = vst [vmem:[#allocation9 + $0x58] sm:$0xf] %v570
    %603 = vst [vmem:[#allocation9 + $0x5c] sm:$0xf] %v571
    %604 = vst [vmem:[#allocation9 + $0x60] sm:$0xf] %v572
    %605 = vst [vmem:[#allocation9 + $0x64] sm:$0xf] %v573
    %606 = vst [vmem:[#allocation9 + $0x68] sm:$0xf] %v574
    %607 = vst [vmem:[#allocation9 + $0x6c] sm:$0xf] %v575
    %608 = vst [vmem:[#allocation9 + $0x70] sm:$0xf] %v576
    %609 = vst [vmem:[#allocation9 + $0x74] sm:$0xf] %v577
    %610 = vst [vmem:[#allocation9 + $0x78] sm:$0xf] %v578
    %611 = vst [vmem:[#allocation9 + $0x7c] sm:$0xf] %v579
    // Predicated region
    $region38: #{tpu_custom_call.1} parent=1 // pred_check
      _
    $region39: #{tpu_custom_call.1} parent=1 // pred_check_branch
      %613 = sbr.rel (0) target = $region41
    $region40: #{tpu_custom_call.1} parent=1 // pred_region
      %615 = vsyncadd [#allocation5], 0
      %s616 = sshll.u32 [#allocation9], 4
      %s617 = int_to_ptr.vmem [resolvable:$true] %s616
      %s618 = sshll.u32 %s6, 4
      %s619 = int_to_ptr.hbm [resolvable:$true] %s618
      %624 = dma.vmem_to_hbm [thread:$0]  %s617, 2048, %s619, [#allocation5], 64, 64, 4
    $region41: #{tpu_custom_call.1} parent=1 // pred_fallthru
      _
    // Predicated region
    $region42: #{tpu_custom_call.1} parent=1 // pred_check
      _
    $region43: #{tpu_custom_call.1} parent=1 // pred_check_branch
      %626 = sbr.rel (0) target = $region45
    $region44: #{tpu_custom_call.1} parent=1 // pred_region
      %628 = dma.done [#allocation5], 2048
    $region45: #{tpu_custom_call.1} parent=1 // pred_fallthru
      _
    %629 = vsyncpa [#allocation4], 1
    %630 = vsyncpa [#allocation7], 1
    %631 = vsyncpa [#allocation5], 1

</llo_original>
